<compile_context>
chip_gen: v7x
topology: tpu7x:2x2x1
jax: 0.10.0
libtpu: 0.0.40
codegen_flags: <defaults>
</compile_context>

<pallas_src>
import functools

import jax
import jax.numpy as jnp
from jax.experimental import pallas as pl
from jax.experimental.pallas import tpu as pltpu


# ---------------------------------------------------------------------------
# Small helpers
# ---------------------------------------------------------------------------
def _gelu_exact(x):
    # exact (erf) GELU, matching torch.nn.GELU() default (approximate='none')
    return 0.5 * x * (1.0 + jax.lax.erf(x * 0.7071067811865476))


def _excite(y, w1, w2t, *, use_mxu):
    """Tiny excitation MLP: sigmoid(gelu(y @ W1.T) @ W2.T).

    y: (TB, C) f32;  w1: (hid, C) (untransposed, C lane-dense);
    w2t: (hid, C)   ->  (TB, C) f32.
    VPU/XLU path keeps channels on lanes in both stages; MXU path for large C.
    """
    w1 = w1.astype(jnp.float32)
    w2t = w2t.astype(jnp.float32)
    if use_mxu:
        h = jax.lax.dot_general(y, w1, (((1,), (1,)), ((), ())),
                                preferred_element_type=jnp.float32)   # (TB, hid)
        h = _gelu_exact(h)
        s = jax.lax.dot_general(h, w2t, (((1,), (0,)), ((), ())),
                                preferred_element_type=jnp.float32)   # (TB, C)
    else:
        h = jnp.sum(y[:, None, :] * w1[None, :, :], axis=-1)          # (TB, hid)
        h = _gelu_exact(h)
        s = jnp.sum(h[:, :, None] * w2t[None, :, :], axis=1)          # (TB, C)
    return jax.nn.sigmoid(s)


def _detect_vmem_capacity():
    try:
        cap = int(pltpu.get_tpu_info().vmem_capacity_bytes)
        return cap if cap > 0 else None
    except Exception:
        return None


def _vmem_limit_bytes(needed, cap):
    """Right-sized scoped-VMEM limit: need + margin, never below the default,
    and leaving headroom for Mosaic internals under the physical capacity."""
    limit = int(needed) + (2 << 20)
    limit = max(limit, 32 << 20)
    if cap is not None:
        limit = min(limit, max(32 << 20, cap - (8 << 20)))
    else:
        limit = min(limit, 56 << 20)
    return limit


def _pick_batch_tile(B, per_batch_bytes, budget, assume_two_cores):
    """Largest batch tile under the VMEM budget, shrunk so we get >= 4 grid
    steps (2 per v7x core) / >= 2 steps (v5e/v6e) while tiles stay >= ~1 MiB."""
    tb = max(1, min(B, budget // max(1, 4 * per_batch_bytes)))
    desired_steps = min(B, 4 if assume_two_cores else 2)
    while tb > 1 and ((B + tb - 1) // tb) < desired_steps and \
            ((tb + 1) // 2) * per_batch_bytes >= (1 << 20):
        tb = (tb + 1) // 2
    while B % tb:
        tb -= 1
    return tb


# ---------------------------------------------------------------------------
# Fast path: fully fused kernel, one batch tile per grid step.
# ---------------------------------------------------------------------------
def _se_fused_kernel(x_ref, w1_ref, w2t_ref, o_ref, *, inv_s, use_mxu):
    # squeeze: f32-accumulated spatial mean over the full logical S
    y = jnp.sum(x_ref[...], axis=-1, dtype=jnp.float32) * inv_s        # (TB, C)
    s = _excite(y, w1_ref[...], w2t_ref[...], use_mxu=use_mxu)         # (TB, C)
    # second streaming pass over VMEM (do NOT keep the first load live across
    # the MLP — avoids vreg spills); scale cast once to the output dtype.
    o_ref[...] = x_ref[...] * s.astype(o_ref.dtype)[:, :, None]


# ---------------------------------------------------------------------------
# Fallback path: spatially tiled partial-pool + scale kernels.
#   * pool writes one partial sum per (batch, spatial-block) -> both grid axes
#     are "parallel" (megacore friendly, no accumulator/grid-order constraint)
#   * ragged spatial tail masked in-kernel (no padding, no extra HBM copies)
# ---------------------------------------------------------------------------
def _se_pool_partial_kernel(x_ref, part_ref, *, ts, s_total):
    x = x_ref[...]                                                      # (TB, C, ts)
    if s_total % ts:                                                    # static
        si = pl.program_id(1)
        lane = jax.lax.broadcasted_iota(jnp.int32, x.shape, x.ndim - 1)
        x = jnp.where(si * ts + lane < s_total, x, jnp.zeros_like(x))
    part_ref[...] = jnp.sum(x, axis=-1, keepdims=True, dtype=jnp.float32)


def _se_scale_kernel(x_ref, s_ref, o_ref):
    # x: (TB, C, ts), s: (TB, C, 1) already in x dtype; OOB tail stores are
    # dropped by Mosaic, so no masking needed for this elementwise pass.
    o_ref[...] = x_ref[...] * s_ref[...]


# ---------------------------------------------------------------------------
# Wrapper
# ---------------------------------------------------------------------------
def se_pallas(x_ncdhw, w1, w2, *, vmem_block_budget=None, donate_x=False):
    """SE block. x: (B, C, D, H, W); w1: (hid, C); w2: (C, hid) (torch Linear)."""
    B, C, D, H, W = x_ncdhw.shape
    S = D * H * W
    hid = w1.shape[0]
    itemsize = jnp.dtype(x_ncdhw.dtype).itemsize
    inv_s = 1.0 / float(S)

    x_flat = x_ncdhw.reshape(B, C, S)
    w2t = w2.T                                   # (hid, C); w1 stays (hid, C)
    weight_bytes = (w1.size + w2t.size) * jnp.dtype(w1.dtype).itemsize

    # --- generation-aware VMEM budgeting -----------------------------------
    cap = _detect_vmem_capacity()
    if vmem_block_budget is not None:
        budget = int(vmem_block_budget)
    elif cap is not None and cap >= (100 << 20):     # v5e / v6e: 128 MiB VMEM
        budget = 52 << 20
    else:                                            # v7x (64 MiB) or unknown
        budget = 24 << 20
    assume_two_cores = cap is not None and cap <= (72 << 20)   # v7x-like

    per_batch_bytes = C * S * itemsize
    # On v7x with B == 1 a single fused grid step leaves one TensorCore idle;
    # prefer the spatially-tiled structure (both passes shard across cores).
    prefer_spatial_split = (B == 1 and assume_two_cores
                            and per_batch_bytes >= (8 << 20))
    use_fused = (4 * per_batch_bytes <= budget) and not prefer_spatial_split

    io_alias = {0: 0} if donate_x else None

    if use_fused:
        # ------------------------- fused fast path -------------------------
        tb = _pick_batch_tile(B, per_batch_bytes, budget, assume_two_cores)
        nb = B // tb
        use_mxu = (C >= 256 and tb >= 8)

        needed = 4 * tb * per_batch_bytes + 4 * weight_bytes
        cost = pl.CostEstimate(
            flops=2 * B * C * S + 4 * B * C * hid,
            transcendentals=B * (hid + C),
            bytes_accessed=2 * B * C * S * itemsize + weight_bytes,
        )

        out_flat = pl.pallas_call(
            functools.partial(_se_fused_kernel, inv_s=inv_s, use_mxu=use_mxu),
            out_shape=jax.ShapeDtypeStruct((B, C, S), x_flat.dtype),
            grid_spec=pltpu.PrefetchScalarGridSpec(
                num_scalar_prefetch=0,
                grid=(nb,),
                in_specs=[
                    # last two block dims == full array dims -> no alignment
                    # requirement, no padding, exact reduction over S.
                    pl.BlockSpec((tb, C, S), lambda b: (b, 0, 0)),
                    pl.BlockSpec(w1.shape, lambda b: (0, 0)),
                    pl.BlockSpec(w2t.shape, lambda b: (0, 0)),
                ],
                out_specs=pl.BlockSpec((tb, C, S), lambda b: (b, 0, 0)),
            ),
            compiler_params=pltpu.CompilerParams(
                dimension_semantics=("parallel",),
                vmem_limit_bytes=_vmem_limit_bytes(needed, cap),
            ),
            cost_estimate=cost,
            input_output_aliases=io_alias if io_alias else {},
        )(x_flat, w1, w2t)

    else:
        # ----------------- spatially-tiled two-kernel fallback --------------
        tb = 1

        # Per-pass tile sizing: pool only double-buffers its input; scale
        # double-buffers input AND output.
        ts_pool = max(128, (budget // (2 * tb * C * itemsize)) // 128 * 128)
        ts_pool = min(ts_pool, S) if ts_pool < S else S
        ts_scale = max(128, (budget // (4 * tb * C * itemsize)) // 128 * 128)
        ts_scale = min(ts_scale, S) if ts_scale < S else S
        ns_pool = pl.cdiv(S, ts_pool)
        ns_scale = pl.cdiv(S, ts_scale)

        # pass 1: per-(batch, spatial-block) partial sums; both axes parallel.
        partials = pl.pallas_call(
            functools.partial(_se_pool_partial_kernel, ts=ts_pool, s_total=S),
            out_shape=jax.ShapeDtypeStruct((B * ns_pool, C, 1), jnp.float32),
            grid_spec=pltpu.PrefetchScalarGridSpec(
                num_scalar_prefetch=0,
                grid=(B, ns_pool),
                in_specs=[pl.BlockSpec((tb, C, ts_pool),
                                       lambda b, si: (b, 0, si))],
                out_specs=pl.BlockSpec(
                    (tb, C, 1), lambda b, si: (b * ns_pool + si, 0, 0)),
            ),
            compiler_params=pltpu.CompilerParams(
                dimension_semantics=("parallel", "parallel"),
                vmem_limit_bytes=_vmem_limit_bytes(
                    2 * tb * C * ts_pool * itemsize + 2 * tb * C * 4, cap),
            ),
            cost_estimate=pl.CostEstimate(
                flops=B * C * S, transcendentals=0,
                bytes_accessed=B * C * S * itemsize + B * ns_pool * C * 4),
        )(x_flat)

        # tiny combine + excitation MLP in plain XLA (B*ns_pool x C elements)
        sums = partials[:, :, 0].reshape(B, ns_pool, C).sum(axis=1)   # (B, C)
        y = sums * inv_s
        scale = _excite(y, w1, w2t, use_mxu=True)                     # (B, C) f32
        scale = scale.astype(x_flat.dtype)[:, :, None]                # (B, C, 1)

        # pass 2: broadcast scale, spatially tiled (lane-dense stores)
        out_flat = pl.pallas_call(
            _se_scale_kernel,
            out_shape=jax.ShapeDtypeStruct((B, C, S), x_flat.dtype),
            grid_spec=pltpu.PrefetchScalarGridSpec(
                num_scalar_prefetch=0,
                grid=(B, ns_scale),
                in_specs=[
                    pl.BlockSpec((tb, C, ts_scale), lambda b, si: (b, 0, si)),
                    pl.BlockSpec((tb, C, 1), lambda b, si: (b, 0, 0)),
                ],
                out_specs=pl.BlockSpec((tb, C, ts_scale),
                                       lambda b, si: (b, 0, si)),
            ),
            compiler_params=pltpu.CompilerParams(
                dimension_semantics=("parallel", "parallel"),
                vmem_limit_bytes=_vmem_limit_bytes(
                    4 * tb * C * ts_scale * itemsize + 2 * tb * C * itemsize,
                    cap),
            ),
            cost_estimate=pl.CostEstimate(
                flops=B * C * S, transcendentals=0,
                bytes_accessed=2 * B * C * S * itemsize),
            input_output_aliases=io_alias if io_alias else {},
        )(x_flat, scale)

    return out_flat.reshape(B, C, D, H, W)


def se_reference(x_ncdhw, w1, w2):
    B, C = x_ncdhw.shape[:2]
    y = jnp.mean(x_ncdhw.reshape(B, C, -1), axis=-1)          # (B, C)
    h = _gelu_exact(y @ w1.T)                                  # (B, hid)
    s = jax.nn.sigmoid(h @ w2.T)                               # (B, C)
    return x_ncdhw * s.reshape(B, C, 1, 1, 1)


if __name__ == "__main__":
    # Module config: SE(inp=32, oup=32, expansion=0.25) -> hidden = 8
    inp = oup = 32
    expansion = 0.25
    hidden = int(inp * expansion)

    key = jax.random.PRNGKey(0)
    k1, k2, kx1, kx2, kx3 = jax.random.split(key, 5)
    # deterministic synthetic weights (PyTorch Linear weight shapes, no bias)
    w1 = jax.random.normal(k1, (hidden, oup), dtype=jnp.float32) * 0.1  # fc[0].weight
    w2 = jax.random.normal(k2, (oup, hidden), dtype=jnp.float32) * 0.1  # fc[2].weight

    # 1) fused fast path, lane-aligned spatial size
    B, C, D, H, W = 2, oup, 4, 8, 8
    x = jax.random.normal(kx1, (B, C, D, H, W), dtype=jnp.float32)
    ref = se_reference(x, w1, w2)
    out = jax.block_until_ready(se_pallas(x, w1, w2))
    assert out.shape == (B, C, D, H, W)
    assert jnp.allclose(out, ref, atol=1e-5, rtol=1e-5), "fused path mismatch"

    # 2) fused path with a ragged (non-multiple-of-128) spatial size — no
    #    wrapper padding / slicing involved.
    x2 = jax.random.normal(kx2, (3, oup, 3, 7, 5), dtype=jnp.float32)   # S = 105
    ref2 = se_reference(x2, w1, w2)
    out2 = jax.block_until_ready(se_pallas(x2, w1, w2))
    assert jnp.allclose(out2, ref2, atol=1e-5, rtol=1e-5), "ragged fused mismatch"

    # 3) force the spatially-tiled two-kernel path (VMEM-safe / B==1 split
    #    structure), exercising the in-kernel ragged-tail mask (S = 273).
    x3 = jax.random.normal(kx3, (2, oup, 3, 7, 13), dtype=jnp.float32)
    ref3 = se_reference(x3, w1, w2)
    out3 = jax.block_until_ready(
        se_pallas(x3, w1, w2, vmem_block_budget=32 * 1024))
    assert jnp.allclose(out3, ref3, atol=1e-5, rtol=1e-5), "tiled path mismatch"

    print("KERNEL_OK")
</pallas_src>

<mosaic_0001>
module attributes {stable_mosaic.version = 11 : i64} {
  func.func @_se_fused_kernel(%arg0: i32, %arg1: memref<2x32x256xf32, #tpu.memory_space<vmem>>, %arg2: memref<8x32xf32, #tpu.memory_space<vmem>>, %arg3: memref<8x32xf32, #tpu.memory_space<vmem>>, %arg4: memref<2x32x256xf32, #tpu.memory_space<vmem>>) attributes {dimension_semantics = [#tpu.dimension_semantics<parallel>], iteration_bounds = array<i64: 1>, scalar_prefetch = 0 : i64, scratch_operands = 0 : i64, tpu.core_type = #tpu.core_type<tc>, window_params = [{transform_indices = @transform_0, window_bounds = array<i64: 2, 32, 256>}, {pipeline_mode = #tpu.pipeline_mode<synchronous>, transform_indices = @transform_1, window_bounds = array<i64: 8, 32>}, {pipeline_mode = #tpu.pipeline_mode<synchronous>, transform_indices = @transform_2, window_bounds = array<i64: 8, 32>}, {transform_indices = @transform_3, window_bounds = array<i64: 2, 32, 256>}]} {
    %c0 = arith.constant 0 : index
    %c0_0 = arith.constant 0 : index
    %c0_1 = arith.constant 0 : index
    %0 = vector.load %arg1[%c0, %c0_0, %c0_1] : memref<2x32x256xf32, #tpu.memory_space<vmem>>, vector<2x32x256xf32>
    %cst = arith.constant dense<0.000000e+00> : vector<2x32xf32>
    %1 = vector.multi_reduction <add>, %0, %cst [2] : vector<2x32x256xf32> to vector<2x32xf32>
    %cst_2 = arith.constant 3.906250e-03 : f32
    %2 = vector.broadcast %cst_2 : f32 to vector<2x32xf32>
    %3 = arith.mulf %1, %2 : vector<2x32xf32>
    %c0_3 = arith.constant 0 : index
    %c0_4 = arith.constant 0 : index
    %4 = vector.load %arg2[%c0_3, %c0_4] : memref<8x32xf32, #tpu.memory_space<vmem>>, vector<8x32xf32>
    %c0_5 = arith.constant 0 : index
    %c0_6 = arith.constant 0 : index
    %5 = vector.load %arg3[%c0_5, %c0_6] : memref<8x32xf32, #tpu.memory_space<vmem>>, vector<8x32xf32>
    %6 = vector.shape_cast %3 : vector<2x32xf32> to vector<2x1x32xf32>
    %7 = vector.shape_cast %4 : vector<8x32xf32> to vector<1x8x32xf32>
    %8 = vector.broadcast %6 : vector<2x1x32xf32> to vector<2x8x32xf32>
    %9 = vector.broadcast %7 : vector<1x8x32xf32> to vector<2x8x32xf32>
    %10 = arith.mulf %8, %9 : vector<2x8x32xf32>
    %cst_7 = arith.constant dense<0.000000e+00> : vector<2x8xf32>
    %11 = vector.multi_reduction <add>, %10, %cst_7 [2] : vector<2x8x32xf32> to vector<2x8xf32>
    %cst_8 = arith.constant 5.000000e-01 : f32
    %12 = vector.broadcast %cst_8 : f32 to vector<2x8xf32>
    %13 = arith.mulf %12, %11 : vector<2x8xf32>
    %cst_9 = arith.constant 0.707106769 : f32
    %14 = vector.broadcast %cst_9 : f32 to vector<2x8xf32>
    %15 = arith.mulf %11, %14 : vector<2x8xf32>
    %16 = math.erf %15 : vector<2x8xf32>
    %cst_10 = arith.constant 1.000000e+00 : f32
    %17 = vector.broadcast %cst_10 : f32 to vector<2x8xf32>
    %18 = arith.addf %17, %16 : vector<2x8xf32>
    %19 = arith.mulf %13, %18 : vector<2x8xf32>
    %20 = vector.shape_cast %19 : vector<2x8xf32> to vector<2x8x1xf32>
    %21 = vector.shape_cast %5 : vector<8x32xf32> to vector<1x8x32xf32>
    %22 = vector.broadcast %20 : vector<2x8x1xf32> to vector<2x8x32xf32>
    %23 = vector.broadcast %21 : vector<1x8x32xf32> to vector<2x8x32xf32>
    %24 = arith.mulf %22, %23 : vector<2x8x32xf32>
    %cst_11 = arith.constant dense<0.000000e+00> : vector<2x32xf32>
    %25 = vector.multi_reduction <add>, %24, %cst_11 [1] : vector<2x8x32xf32> to vector<2x32xf32>
    %26 = arith.negf %25 : vector<2x32xf32>
    %27 = math.exp %26 : vector<2x32xf32>
    %cst_12 = arith.constant 1.000000e+00 : f32
    %28 = vector.broadcast %cst_12 : f32 to vector<2x32xf32>
    %29 = arith.addf %28, %27 : vector<2x32xf32>
    %30 = arith.divf %28, %29 : vector<2x32xf32>
    %c0_13 = arith.constant 0 : index
    %c0_14 = arith.constant 0 : index
    %c0_15 = arith.constant 0 : index
    %31 = vector.load %arg1[%c0_13, %c0_14, %c0_15] : memref<2x32x256xf32, #tpu.memory_space<vmem>>, vector<2x32x256xf32>
    %32 = vector.shape_cast %30 : vector<2x32xf32> to vector<2x32x1xf32>
    %33 = vector.broadcast %32 : vector<2x32x1xf32> to vector<2x32x256xf32>
    %34 = arith.mulf %31, %33 : vector<2x32x256xf32>
    %c0_16 = arith.constant 0 : index
    %c0_17 = arith.constant 0 : index
    %c0_18 = arith.constant 0 : index
    %35 = vector.load %arg4[%c0_16, %c0_17, %c0_18] : memref<2x32x256xf32, #tpu.memory_space<vmem>>, vector<2x32x256xf32>
    tpu.vector_store %arg4[%c0_16, %c0_17, %c0_18], %34 {strides = array<i32>} : memref<2x32x256xf32, #tpu.memory_space<vmem>>, vector<2x32x256xf32>,
    return
  }
  func.func @transform_0(%arg0: i32) -> (i32, i32, i32) {
    %c0_i32 = arith.constant 0 : i32
    %c0_i32_0 = arith.constant 0 : i32
    %c0_i32_1 = arith.constant 0 : i32
    return %arg0, %c0_i32, %c0_i32_0 : i32, i32, i32
  }
  func.func @transform_1(%arg0: i32) -> (i32, i32) {
    %c0_i32 = arith.constant 0 : i32
    %c0_i32_0 = arith.constant 0 : i32
    %c0_i32_1 = arith.constant 0 : i32
    return %c0_i32, %c0_i32_0 : i32, i32
  }
  func.func @transform_2(%arg0: i32) -> (i32, i32) {
    %c0_i32 = arith.constant 0 : i32
    %c0_i32_0 = arith.constant 0 : i32
    %c0_i32_1 = arith.constant 0 : i32
    return %c0_i32, %c0_i32_0 : i32, i32
  }
  func.func @transform_3(%arg0: i32) -> (i32, i32, i32) {
    %c0_i32 = arith.constant 0 : i32
    %c0_i32_0 = arith.constant 0 : i32
    %c0_i32_1 = arith.constant 0 : i32
    return %arg0, %c0_i32, %c0_i32_0 : i32, i32, i32
  }
}

</mosaic_0001>

<llo_original>
// kernel: tpu_custom_call.1
$region0: #{tpu_custom_call.1}
  #allocation0 [shape = 'u32[]', space=smem, size = 0x4, offset = 0x4, fixed_abs, tag = 'smem constant byte address 0x4 - core index']
  #allocation1 [shape = 'u32[144,128]{1,0:T(1,128)}', space=vmem, size = 0x12000, scoped, tag = 'internal scratch']
  %s0 = inlined_call_operand.hbm [shape: f32[2,32,256], index: 0, kind: input, shape index: {}]
  %s1 = inlined_call_operand.hbm [shape: f32[8,32], index: 1, kind: input, shape index: {}]
  %s2 = inlined_call_operand.hbm [shape: f32[8,32], index: 2, kind: input, shape index: {}]
  %s3 = inlined_call_operand.hbm [shape: f32[2,32,256], index: 3, kind: output, shape index: {}]
  %s4 = sld [smem:[#allocation0]]
  $region34: #{tpu_custom_call.1} parent=0
    _
  %s6 = ssub.s32 1, %s4
  %s7 = scalar_select 0, %s6, %s4
  $region1: #{tpu_custom_call.1} parent=0
    #allocation2 [shape = 'u8[65536]{0}', space=vmem, size = 0x10000, scoped, tag = 'input window, operand 0, single buffered']
    #allocation3 [shape = 's32[1]{0}', space=sflag, size = 0x4, scoped, tag = 'scoped memory for tpu_custom_call.1']
    #allocation4 [shape = 's32[1]{0}', space=sflag, size = 0x4, scoped, tag = 'scoped memory for tpu_custom_call.1']
    #allocation5 [shape = 'u8[4096]{0}', space=vmem, size = 0x1000, scoped, tag = 'input window, operand 1, single buffered']
    #allocation6 [shape = 's32[1]{0}', space=sflag, size = 0x4, scoped, tag = 'scoped memory for tpu_custom_call.1']
    #allocation7 [shape = 'u8[4096]{0}', space=vmem, size = 0x1000, scoped, tag = 'input window, operand 2, single buffered']
    #allocation8 [shape = 'u8[65536]{0}', space=vmem, size = 0x10000, scoped, tag = 'output window, operand 0, single buffered']
    %8 = vsyncpa [#allocation3], 0
    %9 = vsyncpa [#allocation6], 0
    %10 = vsyncpa [#allocation4], 0
    // Predicated region
    $region2: #{tpu_custom_call.1} parent=1 // pred_check
      _
    $region3: #{tpu_custom_call.1} parent=1 // pred_check_branch
      %12 = sbr.rel (0) target = $region5
    $region4: #{tpu_custom_call.1} parent=1 // pred_region
      %s14 = ssub.s32 2048, 2048
      %15 = vsyncadd [#allocation3], %s14
      %s16 = sshll.u32 [#allocation2], 4
      %s17 = int_to_ptr.vmem [resolvable:$true] %s16
      %22 = dma.hbm_to_vmem [thread:$0]  %s0, 2048, %s17, [#allocation3], 256, 256, 16
    $region5: #{tpu_custom_call.1} parent=1 // pred_fallthru
      _
    // Predicated region
    $region6: #{tpu_custom_call.1} parent=1 // pred_check
      _
    $region7: #{tpu_custom_call.1} parent=1 // pred_check_branch
      %24 = sbr.rel (0) target = $region9
    $region8: #{tpu_custom_call.1} parent=1 // pred_region
      %s26 = ssub.s32 128, 128
      %27 = vsyncadd [#allocation6], %s26
      %s29 = sshll.u32 [#allocation5], 4
      %s30 = int_to_ptr.vmem [resolvable:$true] %s29
      %32 = dma.hbm_to_vmem [thread:$0]  %s1, 128, %s30, [#allocation6]
    $region9: #{tpu_custom_call.1} parent=1 // pred_fallthru
      _
    // Predicated region
    $region10: #{tpu_custom_call.1} parent=1 // pred_check
      _
    $region11: #{tpu_custom_call.1} parent=1 // pred_check_branch
      %34 = sbr.rel (0) target = $region13
    $region12: #{tpu_custom_call.1} parent=1 // pred_region
      %s36 = ssub.s32 128, 128
      %37 = vsyncadd [#allocation6], %s36
      %s39 = sshll.u32 [#allocation7], 4
      %s40 = int_to_ptr.vmem [resolvable:$true] %s39
      %42 = dma.hbm_to_vmem [thread:$0]  %s2, 128, %s40, [#allocation6]
    $region13: #{tpu_custom_call.1} parent=1 // pred_fallthru
      _
    // Predicated region
    $region14: #{tpu_custom_call.1} parent=1 // pred_check
      _
    $region15: #{tpu_custom_call.1} parent=1 // pred_check_branch
      %44 = sbr.rel (0) target = $region17
    $region16: #{tpu_custom_call.1} parent=1 // pred_region
      %45 = dma.done [#allocation3], 2048
    $region17: #{tpu_custom_call.1} parent=1 // pred_fallthru
      _
    // Predicated region
    $region18: #{tpu_custom_call.1} parent=1 // pred_check
      _
    $region19: #{tpu_custom_call.1} parent=1 // pred_check_branch
      %47 = sbr.rel (0) target = $region21
    $region20: #{tpu_custom_call.1} parent=1 // pred_region
      %48 = dma.done [#allocation6], 128
    $region21: #{tpu_custom_call.1} parent=1 // pred_fallthru
      _
    // Predicated region
    $region22: #{tpu_custom_call.1} parent=1 // pred_check
      _
    $region23: #{tpu_custom_call.1} parent=1 // pred_check_branch
      %50 = sbr.rel (0) target = $region25
    $region24: #{tpu_custom_call.1} parent=1 // pred_region
      %51 = dma.done [#allocation6], 128
    $region25: #{tpu_custom_call.1} parent=1 // pred_fallthru
      _
    %v52 = vld [vmem:[#allocation2] sm:$0xff]
    %v53 = vld [vmem:[#allocation2 + $0x8] sm:$0xff]
    %v54 = vld [vmem:[#allocation2 + $0x10] sm:$0xff]
    %v55 = vld [vmem:[#allocation2 + $0x18] sm:$0xff]
    %v56 = vld [vmem:[#allocation2 + $0x20] sm:$0xff]
    %v57 = vld [vmem:[#allocation2 + $0x28] sm:$0xff]
    %v58 = vld [vmem:[#allocation2 + $0x30] sm:$0xff]
    %v59 = vld [vmem:[#allocation2 + $0x38] sm:$0xff]
    %v60 = vld [vmem:[#allocation2 + $0x40] sm:$0xff]
    %v61 = vld [vmem:[#allocation2 + $0x48] sm:$0xff]
    %v62 = vld [vmem:[#allocation2 + $0x50] sm:$0xff]
    %v63 = vld [vmem:[#allocation2 + $0x58] sm:$0xff]
    %v64 = vld [vmem:[#allocation2 + $0x60] sm:$0xff]
    %v65 = vld [vmem:[#allocation2 + $0x68] sm:$0xff]
    %v66 = vld [vmem:[#allocation2 + $0x70] sm:$0xff]
    %v67 = vld [vmem:[#allocation2 + $0x78] sm:$0xff]
    %v68 = vadd.f32 %v52, %v53
    %69 = vadd.xlane.f32.xlu0 %v68
    %v70 = vpop.xlane.xlu0 %69
    %v71 = vadd.f32 %v54, %v55
    %72 = vadd.xlane.f32.xlu0 %v71
    %v73 = vpop.xlane.xlu0 %72
    %v74 = vadd.f32 %v56, %v57
    %75 = vadd.xlane.f32.xlu0 %v74
    %v76 = vpop.xlane.xlu0 %75
    %v77 = vadd.f32 %v58, %v59
    %78 = vadd.xlane.f32.xlu0 %v77
    %v79 = vpop.xlane.xlu0 %78
    %v80 = vadd.f32 %v60, %v61
    %81 = vadd.xlane.f32.xlu0 %v80
    %v82 = vpop.xlane.xlu0 %81
    %v83 = vadd.f32 %v62, %v63
    %84 = vadd.xlane.f32.xlu0 %v83
    %v85 = vpop.xlane.xlu0 %84
    %v86 = vadd.f32 %v64, %v65
    %87 = vadd.xlane.f32.xlu0 %v86
    %v88 = vpop.xlane.xlu0 %87
    %v89 = vadd.f32 %v66, %v67
    %90 = vadd.xlane.f32.xlu0 %v89
    %v91 = vpop.xlane.xlu0 %90
    %v92 = vmul.f32 %v70, 0.00390625
    %v93 = vmul.f32 %v73, 0.00390625
    %v94 = vmul.f32 %v76, 0.00390625
    %v95 = vmul.f32 %v79, 0.00390625
    %v96 = vmul.f32 %v82, 0.00390625
    %v97 = vmul.f32 %v85, 0.00390625
    %v98 = vmul.f32 %v88, 0.00390625
    %v99 = vmul.f32 %v91, 0.00390625
    %v100 = vld [vmem:[#allocation5] sm:$0xff]
    %v101 = vld [vmem:[#allocation7] sm:$0xff]
    %v103 = vlaneseq
    %v104 = vshrl.u32 %v103, 7
    %v105 = vsub.s32 0, %v104
    %v106 = vrot.slane %v100, %v105
    %108 = vbcast.lane.b32.xlu0 %v106, 256
    %v109 = vpop.permute.xlu0 %108
    %s111 = sor.u32 256, 8
    %112 = vbcast.lane.b32.xlu0 %v106, %s111
    %v113 = vpop.permute.xlu0 %112
    %s115 = sor.u32 256, 16
    %116 = vbcast.lane.b32.xlu0 %v106, %s115
    %v117 = vpop.permute.xlu0 %116
    %s119 = sor.u32 256, 24
    %120 = vbcast.lane.b32.xlu0 %v106, %s119
    %v121 = vpop.permute.xlu0 %120
    %v122 = vlaneseq
    %v123 = vshrl.u32 %v122, 7
    %v124 = vsub.s32 1, %v123
    %v125 = vrot.slane %v100, %v124
    %127 = vbcast.lane.b32.xlu0 %v125, 256
    %v128 = vpop.permute.xlu0 %127
    %s130 = sor.u32 256, 8
    %131 = vbcast.lane.b32.xlu0 %v125, %s130
    %v132 = vpop.permute.xlu0 %131
    %s134 = sor.u32 256, 16
    %135 = vbcast.lane.b32.xlu0 %v125, %s134
    %v136 = vpop.permute.xlu0 %135
    %s138 = sor.u32 256, 24
    %139 = vbcast.lane.b32.xlu0 %v125, %s138
    %v140 = vpop.permute.xlu0 %139
    %v141 = vlaneseq
    %v142 = vshrl.u32 %v141, 7
    %v143 = vsub.s32 2, %v142
    %v144 = vrot.slane %v100, %v143
    %146 = vbcast.lane.b32.xlu0 %v144, 256
    %v147 = vpop.permute.xlu0 %146
    %s149 = sor.u32 256, 8
    %150 = vbcast.lane.b32.xlu0 %v144, %s149
    %v151 = vpop.permute.xlu0 %150
    %s153 = sor.u32 256, 16
    %154 = vbcast.lane.b32.xlu0 %v144, %s153
    %v155 = vpop.permute.xlu0 %154
    %s157 = sor.u32 256, 24
    %158 = vbcast.lane.b32.xlu0 %v144, %s157
    %v159 = vpop.permute.xlu0 %158
    %v160 = vlaneseq
    %v161 = vshrl.u32 %v160, 7
    %v162 = vsub.s32 3, %v161
    %v163 = vrot.slane %v100, %v162
    %165 = vbcast.lane.b32.xlu0 %v163, 256
    %v166 = vpop.permute.xlu0 %165
    %s168 = sor.u32 256, 8
    %169 = vbcast.lane.b32.xlu0 %v163, %s168
    %v170 = vpop.permute.xlu0 %169
    %s172 = sor.u32 256, 16
    %173 = vbcast.lane.b32.xlu0 %v163, %s172
    %v174 = vpop.permute.xlu0 %173
    %s176 = sor.u32 256, 24
    %177 = vbcast.lane.b32.xlu0 %v163, %s176
    %v178 = vpop.permute.xlu0 %177
    %v179 = vlaneseq
    %v180 = vshrl.u32 %v179, 7
    %v181 = vsub.s32 4, %v180
    %v182 = vrot.slane %v100, %v181
    %184 = vbcast.lane.b32.xlu0 %v182, 256
    %v185 = vpop.permute.xlu0 %184
    %s187 = sor.u32 256, 8
    %188 = vbcast.lane.b32.xlu0 %v182, %s187
    %v189 = vpop.permute.xlu0 %188
    %s191 = sor.u32 256, 16
    %192 = vbcast.lane.b32.xlu0 %v182, %s191
    %v193 = vpop.permute.xlu0 %192
    %s195 = sor.u32 256, 24
    %196 = vbcast.lane.b32.xlu0 %v182, %s195
    %v197 = vpop.permute.xlu0 %196
    %v198 = vlaneseq
    %v199 = vshrl.u32 %v198, 7
    %v200 = vsub.s32 5, %v199
    %v201 = vrot.slane %v100, %v200
    %203 = vbcast.lane.b32.xlu0 %v201, 256
    %v204 = vpop.permute.xlu0 %203
    %s206 = sor.u32 256, 8
    %207 = vbcast.lane.b32.xlu0 %v201, %s206
    %v208 = vpop.permute.xlu0 %207
    %s210 = sor.u32 256, 16
    %211 = vbcast.lane.b32.xlu0 %v201, %s210
    %v212 = vpop.permute.xlu0 %211
    %s214 = sor.u32 256, 24
    %215 = vbcast.lane.b32.xlu0 %v201, %s214
    %v216 = vpop.permute.xlu0 %215
    %v217 = vlaneseq
    %v218 = vshrl.u32 %v217, 7
    %v219 = vsub.s32 6, %v218
    %v220 = vrot.slane %v100, %v219
    %222 = vbcast.lane.b32.xlu0 %v220, 256
    %v223 = vpop.permute.xlu0 %222
    %s225 = sor.u32 256, 8
    %226 = vbcast.lane.b32.xlu0 %v220, %s225
    %v227 = vpop.permute.xlu0 %226
    %s229 = sor.u32 256, 16
    %230 = vbcast.lane.b32.xlu0 %v220, %s229
    %v231 = vpop.permute.xlu0 %230
    %s233 = sor.u32 256, 24
    %234 = vbcast.lane.b32.xlu0 %v220, %s233
    %v235 = vpop.permute.xlu0 %234
    %v236 = vlaneseq
    %v237 = vshrl.u32 %v236, 7
    %v238 = vsub.s32 7, %v237
    %v239 = vrot.slane %v100, %v238
    %241 = vbcast.lane.b32.xlu0 %v239, 256
    %v242 = vpop.permute.xlu0 %241
    %s244 = sor.u32 256, 8
    %245 = vbcast.lane.b32.xlu0 %v239, %s244
    %v246 = vpop.permute.xlu0 %245
    %s248 = sor.u32 256, 16
    %249 = vbcast.lane.b32.xlu0 %v239, %s248
    %v250 = vpop.permute.xlu0 %249
    %s252 = sor.u32 256, 24
    %253 = vbcast.lane.b32.xlu0 %v239, %s252
    %v254 = vpop.permute.xlu0 %253
    %v287 = vmul.f32 %v92, %v109
    %v288 = vmul.f32 %v93, %v113
    %v289 = vmul.f32 %v94, %v117
    %v290 = vmul.f32 %v95, %v121
    %v291 = vmul.f32 %v92, %v128
    %v292 = vmul.f32 %v93, %v132
    %v293 = vmul.f32 %v94, %v136
    %v294 = vmul.f32 %v95, %v140
    %v295 = vmul.f32 %v92, %v147
    %v296 = vmul.f32 %v93, %v151
    %v297 = vmul.f32 %v94, %v155
    %v298 = vmul.f32 %v95, %v159
    %v299 = vmul.f32 %v92, %v166
    %v300 = vmul.f32 %v93, %v170
    %v301 = vmul.f32 %v94, %v174
    %v302 = vmul.f32 %v95, %v178
    %v303 = vmul.f32 %v92, %v185
    %v304 = vmul.f32 %v93, %v189
    %v305 = vmul.f32 %v94, %v193
    %v306 = vmul.f32 %v95, %v197
    %v307 = vmul.f32 %v92, %v204
    %v308 = vmul.f32 %v93, %v208
    %v309 = vmul.f32 %v94, %v212
    %v310 = vmul.f32 %v95, %v216
    %v311 = vmul.f32 %v92, %v223
    %v312 = vmul.f32 %v93, %v227
    %v313 = vmul.f32 %v94, %v231
    %v314 = vmul.f32 %v95, %v235
    %v315 = vmul.f32 %v92, %v242
    %v316 = vmul.f32 %v93, %v246
    %v317 = vmul.f32 %v94, %v250
    %v318 = vmul.f32 %v95, %v254
    %v319 = vmul.f32 %v96, %v109
    %v320 = vmul.f32 %v97, %v113
    %v321 = vmul.f32 %v98, %v117
    %v322 = vmul.f32 %v99, %v121
    %v323 = vmul.f32 %v96, %v128
    %v324 = vmul.f32 %v97, %v132
    %v325 = vmul.f32 %v98, %v136
    %v326 = vmul.f32 %v99, %v140
    %v327 = vmul.f32 %v96, %v147
    %v328 = vmul.f32 %v97, %v151
    %v329 = vmul.f32 %v98, %v155
    %v330 = vmul.f32 %v99, %v159
    %v331 = vmul.f32 %v96, %v166
    %v332 = vmul.f32 %v97, %v170
    %v333 = vmul.f32 %v98, %v174
    %v334 = vmul.f32 %v99, %v178
    %v335 = vmul.f32 %v96, %v185
    %v336 = vmul.f32 %v97, %v189
    %v337 = vmul.f32 %v98, %v193
    %v338 = vmul.f32 %v99, %v197
    %v339 = vmul.f32 %v96, %v204
    %v340 = vmul.f32 %v97, %v208
    %v341 = vmul.f32 %v98, %v212
    %v342 = vmul.f32 %v99, %v216
    %v343 = vmul.f32 %v96, %v223
    %v344 = vmul.f32 %v97, %v227
    %v345 = vmul.f32 %v98, %v231
    %v346 = vmul.f32 %v99, %v235
    %v347 = vmul.f32 %v96, %v242
    %v348 = vmul.f32 %v97, %v246
    %v349 = vmul.f32 %v98, %v250
    %v350 = vmul.f32 %v99, %v254
    %415 = vset.pattern.permute.xlu0 0
    %416 = vperm.xlu0 %415, %v287
    %v417 = vpop.permute.xlu0 %416
    %418 = vset.pattern.permute.xlu0 0
    %419 = vperm.xlu0 %418, %v288
    %v420 = vpop.permute.xlu0 %419
    %421 = vset.pattern.permute.xlu0 0
    %422 = vperm.xlu0 %421, %v289
    %v423 = vpop.permute.xlu0 %422
    %424 = vset.pattern.permute.xlu0 0
    %425 = vperm.xlu0 %424, %v290
    %v426 = vpop.permute.xlu0 %425
    %427 = vset.pattern.permute.xlu0 0
    %428 = vperm.xlu0 %427, %v291
    %v429 = vpop.permute.xlu0 %428
    %430 = vset.pattern.permute.xlu0 0
    %431 = vperm.xlu0 %430, %v292
    %v432 = vpop.permute.xlu0 %431
    %433 = vset.pattern.permute.xlu0 0
    %434 = vperm.xlu0 %433, %v293
    %v435 = vpop.permute.xlu0 %434
    %436 = vset.pattern.permute.xlu0 0
    %437 = vperm.xlu0 %436, %v294
    %v438 = vpop.permute.xlu0 %437
    %439 = vset.pattern.permute.xlu0 0
    %440 = vperm.xlu0 %439, %v295
    %v441 = vpop.permute.xlu0 %440
    %442 = vset.pattern.permute.xlu0 0
    %443 = vperm.xlu0 %442, %v296
    %v444 = vpop.permute.xlu0 %443
    %445 = vset.pattern.permute.xlu0 0
    %446 = vperm.xlu0 %445, %v297
    %v447 = vpop.permute.xlu0 %446
    %448 = vset.pattern.permute.xlu0 0
    %449 = vperm.xlu0 %448, %v298
    %v450 = vpop.permute.xlu0 %449
    %451 = vset.pattern.permute.xlu0 0
    %452 = vperm.xlu0 %451, %v299
    %v453 = vpop.permute.xlu0 %452
    %454 = vset.pattern.permute.xlu0 0
    %455 = vperm.xlu0 %454, %v300
    %v456 = vpop.permute.xlu0 %455
    %457 = vset.pattern.permute.xlu0 0
    %458 = vperm.xlu0 %457, %v301
    %v459 = vpop.permute.xlu0 %458
    %460 = vset.pattern.permute.xlu0 0
    %461 = vperm.xlu0 %460, %v302
    %v462 = vpop.permute.xlu0 %461
    %463 = vset.pattern.permute.xlu0 0
    %464 = vperm.xlu0 %463, %v303
    %v465 = vpop.permute.xlu0 %464
    %466 = vset.pattern.permute.xlu0 0
    %467 = vperm.xlu0 %466, %v304
    %v468 = vpop.permute.xlu0 %467
    %469 = vset.pattern.permute.xlu0 0
    %470 = vperm.xlu0 %469, %v305
    %v471 = vpop.permute.xlu0 %470
    %472 = vset.pattern.permute.xlu0 0
    %473 = vperm.xlu0 %472, %v306
    %v474 = vpop.permute.xlu0 %473
    %475 = vset.pattern.permute.xlu0 0
    %476 = vperm.xlu0 %475, %v307
    %v477 = vpop.permute.xlu0 %476
    %478 = vset.pattern.permute.xlu0 0
    %479 = vperm.xlu0 %478, %v308
    %v480 = vpop.permute.xlu0 %479
    %481 = vset.pattern.permute.xlu0 0
    %482 = vperm.xlu0 %481, %v309
    %v483 = vpop.permute.xlu0 %482
    %484 = vset.pattern.permute.xlu0 0
    %485 = vperm.xlu0 %484, %v310
    %v486 = vpop.permute.xlu0 %485
    %487 = vset.pattern.permute.xlu0 0
    %488 = vperm.xlu0 %487, %v311
    %v489 = vpop.permute.xlu0 %488
    %490 = vset.pattern.permute.xlu0 0
    %491 = vperm.xlu0 %490, %v312
    %v492 = vpop.permute.xlu0 %491
    %493 = vset.pattern.permute.xlu0 0
    %494 = vperm.xlu0 %493, %v313
    %v495 = vpop.permute.xlu0 %494
    %496 = vset.pattern.permute.xlu0 0
    %497 = vperm.xlu0 %496, %v314
    %v498 = vpop.permute.xlu0 %497
    %499 = vset.pattern.permute.xlu0 0
    %500 = vperm.xlu0 %499, %v315
    %v501 = vpop.permute.xlu0 %500
    %502 = vset.pattern.permute.xlu0 0
    %503 = vperm.xlu0 %502, %v316
    %v504 = vpop.permute.xlu0 %503
    %505 = vset.pattern.permute.xlu0 0
    %506 = vperm.xlu0 %505, %v317
    %v507 = vpop.permute.xlu0 %506
    %508 = vset.pattern.permute.xlu0 0
    %509 = vperm.xlu0 %508, %v318
    %v510 = vpop.permute.xlu0 %509
    %511 = vset.pattern.permute.xlu0 0
    %512 = vperm.xlu0 %511, %v319
    %v513 = vpop.permute.xlu0 %512
    %514 = vset.pattern.permute.xlu0 0
    %515 = vperm.xlu0 %514, %v320
    %v516 = vpop.permute.xlu0 %515
    %517 = vset.pattern.permute.xlu0 0
    %518 = vperm.xlu0 %517, %v321
    %v519 = vpop.permute.xlu0 %518
    %520 = vset.pattern.permute.xlu0 0
    %521 = vperm.xlu0 %520, %v322
    %v522 = vpop.permute.xlu0 %521
    %523 = vset.pattern.permute.xlu0 0
    %524 = vperm.xlu0 %523, %v323
    %v525 = vpop.permute.xlu0 %524
    %526 = vset.pattern.permute.xlu0 0
    %527 = vperm.xlu0 %526, %v324
    %v528 = vpop.permute.xlu0 %527
    %529 = vset.pattern.permute.xlu0 0
    %530 = vperm.xlu0 %529, %v325
    %v531 = vpop.permute.xlu0 %530
    %532 = vset.pattern.permute.xlu0 0
    %533 = vperm.xlu0 %532, %v326
    %v534 = vpop.permute.xlu0 %533
    %535 = vset.pattern.permute.xlu0 0
    %536 = vperm.xlu0 %535, %v327
    %v537 = vpop.permute.xlu0 %536
    %538 = vset.pattern.permute.xlu0 0
    %539 = vperm.xlu0 %538, %v328
    %v540 = vpop.permute.xlu0 %539
    %541 = vset.pattern.permute.xlu0 0
    %542 = vperm.xlu0 %541, %v329
    %v543 = vpop.permute.xlu0 %542
    %544 = vset.pattern.permute.xlu0 0
    %545 = vperm.xlu0 %544, %v330
    %v546 = vpop.permute.xlu0 %545
    %547 = vset.pattern.permute.xlu0 0
    %548 = vperm.xlu0 %547, %v331
    %v549 = vpop.permute.xlu0 %548
    %550 = vset.pattern.permute.xlu0 0
    %551 = vperm.xlu0 %550, %v332
    %v552 = vpop.permute.xlu0 %551
    %553 = vset.pattern.permute.xlu0 0
    %554 = vperm.xlu0 %553, %v333
    %v555 = vpop.permute.xlu0 %554
    %556 = vset.pattern.permute.xlu0 0
    %557 = vperm.xlu0 %556, %v334
    %v558 = vpop.permute.xlu0 %557
    %559 = vset.pattern.permute.xlu0 0
    %560 = vperm.xlu0 %559, %v335
    %v561 = vpop.permute.xlu0 %560
    %562 = vset.pattern.permute.xlu0 0
    %563 = vperm.xlu0 %562, %v336
    %v564 = vpop.permute.xlu0 %563
    %565 = vset.pattern.permute.xlu0 0
    %566 = vperm.xlu0 %565, %v337
    %v567 = vpop.permute.xlu0 %566
    %568 = vset.pattern.permute.xlu0 0
    %569 = vperm.xlu0 %568, %v338
    %v570 = vpop.permute.xlu0 %569
    %571 = vset.pattern.permute.xlu0 0
    %572 = vperm.xlu0 %571, %v339
    %v573 = vpop.permute.xlu0 %572
    %574 = vset.pattern.permute.xlu0 0
    %575 = vperm.xlu0 %574, %v340
    %v576 = vpop.permute.xlu0 %575
    %577 = vset.pattern.permute.xlu0 0
    %578 = vperm.xlu0 %577, %v341
    %v579 = vpop.permute.xlu0 %578
    %580 = vset.pattern.permute.xlu0 0
    %581 = vperm.xlu0 %580, %v342
    %v582 = vpop.permute.xlu0 %581
    %583 = vset.pattern.permute.xlu0 0
    %584 = vperm.xlu0 %583, %v343
    %v585 = vpop.permute.xlu0 %584
    %586 = vset.pattern.permute.xlu0 0
    %587 = vperm.xlu0 %586, %v344
    %v588 = vpop.permute.xlu0 %587
    %589 = vset.pattern.permute.xlu0 0
    %590 = vperm.xlu0 %589, %v345
    %v591 = vpop.permute.xlu0 %590
    %592 = vset.pattern.permute.xlu0 0
    %593 = vperm.xlu0 %592, %v346
    %v594 = vpop.permute.xlu0 %593
    %595 = vset.pattern.permute.xlu0 0
    %596 = vperm.xlu0 %595, %v347
    %v597 = vpop.permute.xlu0 %596
    %598 = vset.pattern.permute.xlu0 0
    %599 = vperm.xlu0 %598, %v348
    %v600 = vpop.permute.xlu0 %599
    %601 = vset.pattern.permute.xlu0 0
    %602 = vperm.xlu0 %601, %v349
    %v603 = vpop.permute.xlu0 %602
    %604 = vset.pattern.permute.xlu0 0
    %605 = vperm.xlu0 %604, %v350
    %v606 = vpop.permute.xlu0 %605
    %v607 = vlaneseq
    %v608 = vand.u32 %v607, 127
    %v609 = vlaneseq
    %v610 = vshrl.u32 %v609, 7
    %v611 = vsub.s32 %v608, %v610
    %v612 = vrot.slane %v417, %v611
    %v613 = vadd.s32 %v608, 4294967288
    %v614 = vlaneseq
    %v615 = vshrl.u32 %v614, 7
    %v616 = vsub.s32 %v613, %v615
    %v617 = vrot.slane %v420, %v616
    %vm618 = vcmask 130112
    %v619 = vsel %vm618, %v617, %v612
    %v620 = vadd.s32 %v608, 4294967280
    %v621 = vlaneseq
    %v622 = vshrl.u32 %v621, 7
    %v623 = vsub.s32 %v620, %v622
    %v624 = vrot.slane %v423, %v623
    %vm625 = vcmask 195712
    %v626 = vsel %vm625, %v624, %v619
    %v627 = vadd.s32 %v608, 4294967272
    %v628 = vlaneseq
    %v629 = vshrl.u32 %v628, 7
    %v630 = vsub.s32 %v627, %v629
    %v631 = vrot.slane %v426, %v630
    %vm632 = vcmask 261312
    %v633 = vsel %vm632, %v631, %v626
    %v634 = vlaneseq
    %v635 = vshrl.u32 %v634, 7
    %v636 = vsub.s32 %v608, %v635
    %v637 = vrot.slane %v429, %v636
    %v638 = vlaneseq
    %v639 = vshrl.u32 %v638, 7
    %v640 = vsub.s32 %v613, %v639
    %v641 = vrot.slane %v432, %v640
    %v642 = vsel %vm618, %v641, %v637
    %v643 = vlaneseq
    %v644 = vshrl.u32 %v643, 7
    %v645 = vsub.s32 %v620, %v644
    %v646 = vrot.slane %v435, %v645
    %v647 = vsel %vm625, %v646, %v642
    %v648 = vlaneseq
    %v649 = vshrl.u32 %v648, 7
    %v650 = vsub.s32 %v627, %v649
    %v651 = vrot.slane %v438, %v650
    %v652 = vsel %vm632, %v651, %v647
    %v653 = vlaneseq
    %v654 = vshrl.u32 %v653, 7
    %v655 = vsub.s32 %v608, %v654
    %v656 = vrot.slane %v441, %v655
    %v657 = vlaneseq
    %v658 = vshrl.u32 %v657, 7
    %v659 = vsub.s32 %v613, %v658
    %v660 = vrot.slane %v444, %v659
    %v661 = vsel %vm618, %v660, %v656
    %v662 = vlaneseq
    %v663 = vshrl.u32 %v662, 7
    %v664 = vsub.s32 %v620, %v663
    %v665 = vrot.slane %v447, %v664
    %v666 = vsel %vm625, %v665, %v661
    %v667 = vlaneseq
    %v668 = vshrl.u32 %v667, 7
    %v669 = vsub.s32 %v627, %v668
    %v670 = vrot.slane %v450, %v669
    %v671 = vsel %vm632, %v670, %v666
    %v672 = vlaneseq
    %v673 = vshrl.u32 %v672, 7
    %v674 = vsub.s32 %v608, %v673
    %v675 = vrot.slane %v453, %v674
    %v676 = vlaneseq
    %v677 = vshrl.u32 %v676, 7
    %v678 = vsub.s32 %v613, %v677
    %v679 = vrot.slane %v456, %v678
    %v680 = vsel %vm618, %v679, %v675
    %v681 = vlaneseq
    %v682 = vshrl.u32 %v681, 7
    %v683 = vsub.s32 %v620, %v682
    %v684 = vrot.slane %v459, %v683
    %v685 = vsel %vm625, %v684, %v680
    %v686 = vlaneseq
    %v687 = vshrl.u32 %v686, 7
    %v688 = vsub.s32 %v627, %v687
    %v689 = vrot.slane %v462, %v688
    %v690 = vsel %vm632, %v689, %v685
    %v691 = vlaneseq
    %v692 = vshrl.u32 %v691, 7
    %v693 = vsub.s32 %v608, %v692
    %v694 = vrot.slane %v465, %v693
    %v695 = vlaneseq
    %v696 = vshrl.u32 %v695, 7
    %v697 = vsub.s32 %v613, %v696
    %v698 = vrot.slane %v468, %v697
    %v699 = vsel %vm618, %v698, %v694
    %v700 = vlaneseq
    %v701 = vshrl.u32 %v700, 7
    %v702 = vsub.s32 %v620, %v701
    %v703 = vrot.slane %v471, %v702
    %v704 = vsel %vm625, %v703, %v699
    %v705 = vlaneseq
    %v706 = vshrl.u32 %v705, 7
    %v707 = vsub.s32 %v627, %v706
    %v708 = vrot.slane %v474, %v707
    %v709 = vsel %vm632, %v708, %v704
    %v710 = vlaneseq
    %v711 = vshrl.u32 %v710, 7
    %v712 = vsub.s32 %v608, %v711
    %v713 = vrot.slane %v477, %v712
    %v714 = vlaneseq
    %v715 = vshrl.u32 %v714, 7
    %v716 = vsub.s32 %v613, %v715
    %v717 = vrot.slane %v480, %v716
    %v718 = vsel %vm618, %v717, %v713
    %v719 = vlaneseq
    %v720 = vshrl.u32 %v719, 7
    %v721 = vsub.s32 %v620, %v720
    %v722 = vrot.slane %v483, %v721
    %v723 = vsel %vm625, %v722, %v718
    %v724 = vlaneseq
    %v725 = vshrl.u32 %v724, 7
    %v726 = vsub.s32 %v627, %v725
    %v727 = vrot.slane %v486, %v726
    %v728 = vsel %vm632, %v727, %v723
    %v729 = vlaneseq
    %v730 = vshrl.u32 %v729, 7
    %v731 = vsub.s32 %v608, %v730
    %v732 = vrot.slane %v489, %v731
    %v733 = vlaneseq
    %v734 = vshrl.u32 %v733, 7
    %v735 = vsub.s32 %v613, %v734
    %v736 = vrot.slane %v492, %v735
    %v737 = vsel %vm618, %v736, %v732
    %v738 = vlaneseq
    %v739 = vshrl.u32 %v738, 7
    %v740 = vsub.s32 %v620, %v739
    %v741 = vrot.slane %v495, %v740
    %v742 = vsel %vm625, %v741, %v737
    %v743 = vlaneseq
    %v744 = vshrl.u32 %v743, 7
    %v745 = vsub.s32 %v627, %v744
    %v746 = vrot.slane %v498, %v745
    %v747 = vsel %vm632, %v746, %v742
    %v748 = vlaneseq
    %v749 = vshrl.u32 %v748, 7
    %v750 = vsub.s32 %v608, %v749
    %v751 = vrot.slane %v501, %v750
    %v752 = vlaneseq
    %v753 = vshrl.u32 %v752, 7
    %v754 = vsub.s32 %v613, %v753
    %v755 = vrot.slane %v504, %v754
    %v756 = vsel %vm618, %v755, %v751
    %v757 = vlaneseq
    %v758 = vshrl.u32 %v757, 7
    %v759 = vsub.s32 %v620, %v758
    %v760 = vrot.slane %v507, %v759
    %v761 = vsel %vm625, %v760, %v756
    %v762 = vlaneseq
    %v763 = vshrl.u32 %v762, 7
    %v764 = vsub.s32 %v627, %v763
    %v765 = vrot.slane %v510, %v764
    %v766 = vsel %vm632, %v765, %v761
    %v767 = vlaneseq
    %v768 = vshrl.u32 %v767, 7
    %v769 = vsub.s32 %v608, %v768
    %v770 = vrot.slane %v513, %v769
    %v771 = vlaneseq
    %v772 = vshrl.u32 %v771, 7
    %v773 = vsub.s32 %v613, %v772
    %v774 = vrot.slane %v516, %v773
    %v775 = vsel %vm618, %v774, %v770
    %v776 = vlaneseq
    %v777 = vshrl.u32 %v776, 7
    %v778 = vsub.s32 %v620, %v777
    %v779 = vrot.slane %v519, %v778
    %v780 = vsel %vm625, %v779, %v775
    %v781 = vlaneseq
    %v782 = vshrl.u32 %v781, 7
    %v783 = vsub.s32 %v627, %v782
    %v784 = vrot.slane %v522, %v783
    %v785 = vsel %vm632, %v784, %v780
    %v786 = vlaneseq
    %v787 = vshrl.u32 %v786, 7
    %v788 = vsub.s32 %v608, %v787
    %v789 = vrot.slane %v525, %v788
    %v790 = vlaneseq
    %v791 = vshrl.u32 %v790, 7
    %v792 = vsub.s32 %v613, %v791
    %v793 = vrot.slane %v528, %v792
    %v794 = vsel %vm618, %v793, %v789
    %v795 = vlaneseq
    %v796 = vshrl.u32 %v795, 7
    %v797 = vsub.s32 %v620, %v796
    %v798 = vrot.slane %v531, %v797
    %v799 = vsel %vm625, %v798, %v794
    %v800 = vlaneseq
    %v801 = vshrl.u32 %v800, 7
    %v802 = vsub.s32 %v627, %v801
    %v803 = vrot.slane %v534, %v802
    %v804 = vsel %vm632, %v803, %v799
    %v805 = vlaneseq
    %v806 = vshrl.u32 %v805, 7
    %v807 = vsub.s32 %v608, %v806
    %v808 = vrot.slane %v537, %v807
    %v809 = vlaneseq
    %v810 = vshrl.u32 %v809, 7
    %v811 = vsub.s32 %v613, %v810
    %v812 = vrot.slane %v540, %v811
    %v813 = vsel %vm618, %v812, %v808
    %v814 = vlaneseq
    %v815 = vshrl.u32 %v814, 7
    %v816 = vsub.s32 %v620, %v815
    %v817 = vrot.slane %v543, %v816
    %v818 = vsel %vm625, %v817, %v813
    %v819 = vlaneseq
    %v820 = vshrl.u32 %v819, 7
    %v821 = vsub.s32 %v627, %v820
    %v822 = vrot.slane %v546, %v821
    %v823 = vsel %vm632, %v822, %v818
    %v824 = vlaneseq
    %v825 = vshrl.u32 %v824, 7
    %v826 = vsub.s32 %v608, %v825
    %v827 = vrot.slane %v549, %v826
    %v828 = vlaneseq
    %v829 = vshrl.u32 %v828, 7
    %v830 = vsub.s32 %v613, %v829
    %v831 = vrot.slane %v552, %v830
    %v832 = vsel %vm618, %v831, %v827
    %v833 = vlaneseq
    %v834 = vshrl.u32 %v833, 7
    %v835 = vsub.s32 %v620, %v834
    %v836 = vrot.slane %v555, %v835
    %v837 = vsel %vm625, %v836, %v832
    %v838 = vlaneseq
    %v839 = vshrl.u32 %v838, 7
    %v840 = vsub.s32 %v627, %v839
    %v841 = vrot.slane %v558, %v840
    %v842 = vsel %vm632, %v841, %v837
    %v843 = vlaneseq
    %v844 = vshrl.u32 %v843, 7
    %v845 = vsub.s32 %v608, %v844
    %v846 = vrot.slane %v561, %v845
    %v847 = vlaneseq
    %v848 = vshrl.u32 %v847, 7
    %v849 = vsub.s32 %v613, %v848
    %v850 = vrot.slane %v564, %v849
    %v851 = vsel %vm618, %v850, %v846
    %v852 = vlaneseq
    %v853 = vshrl.u32 %v852, 7
    %v854 = vsub.s32 %v620, %v853
    %v855 = vrot.slane %v567, %v854
    %v856 = vsel %vm625, %v855, %v851
    %v857 = vlaneseq
    %v858 = vshrl.u32 %v857, 7
    %v859 = vsub.s32 %v627, %v858
    %v860 = vrot.slane %v570, %v859
    %v861 = vsel %vm632, %v860, %v856
    %v862 = vlaneseq
    %v863 = vshrl.u32 %v862, 7
    %v864 = vsub.s32 %v608, %v863
    %v865 = vrot.slane %v573, %v864
    %v866 = vlaneseq
    %v867 = vshrl.u32 %v866, 7
    %v868 = vsub.s32 %v613, %v867
    %v869 = vrot.slane %v576, %v868
    %v870 = vsel %vm618, %v869, %v865
    %v871 = vlaneseq
    %v872 = vshrl.u32 %v871, 7
    %v873 = vsub.s32 %v620, %v872
    %v874 = vrot.slane %v579, %v873
    %v875 = vsel %vm625, %v874, %v870
    %v876 = vlaneseq
    %v877 = vshrl.u32 %v876, 7
    %v878 = vsub.s32 %v627, %v877
    %v879 = vrot.slane %v582, %v878
    %v880 = vsel %vm632, %v879, %v875
    %v881 = vlaneseq
    %v882 = vshrl.u32 %v881, 7
    %v883 = vsub.s32 %v608, %v882
    %v884 = vrot.slane %v585, %v883
    %v885 = vlaneseq
    %v886 = vshrl.u32 %v885, 7
    %v887 = vsub.s32 %v613, %v886
    %v888 = vrot.slane %v588, %v887
    %v889 = vsel %vm618, %v888, %v884
    %v890 = vlaneseq
    %v891 = vshrl.u32 %v890, 7
    %v892 = vsub.s32 %v620, %v891
    %v893 = vrot.slane %v591, %v892
    %v894 = vsel %vm625, %v893, %v889
    %v895 = vlaneseq
    %v896 = vshrl.u32 %v895, 7
    %v897 = vsub.s32 %v627, %v896
    %v898 = vrot.slane %v594, %v897
    %v899 = vsel %vm632, %v898, %v894
    %v900 = vlaneseq
    %v901 = vshrl.u32 %v900, 7
    %v902 = vsub.s32 %v608, %v901
    %v903 = vrot.slane %v597, %v902
    %v904 = vlaneseq
    %v905 = vshrl.u32 %v904, 7
    %v906 = vsub.s32 %v613, %v905
    %v907 = vrot.slane %v600, %v906
    %v908 = vsel %vm618, %v907, %v903
    %v909 = vlaneseq
    %v910 = vshrl.u32 %v909, 7
    %v911 = vsub.s32 %v620, %v910
    %v912 = vrot.slane %v603, %v911
    %v913 = vsel %vm625, %v912, %v908
    %v914 = vlaneseq
    %v915 = vshrl.u32 %v914, 7
    %v916 = vsub.s32 %v627, %v915
    %v917 = vrot.slane %v606, %v916
    %v918 = vsel %vm632, %v917, %v913
    %vm919 = vcmask 1041409
    %v920 = vsel %vm919, %v652, %v633
    %vm921 = vcmask 1042434
    %v922 = vsel %vm921, %v671, %v920
    %vm923 = vcmask 1043459
    %v924 = vsel %vm923, %v690, %v922
    %vm925 = vcmask 1044484
    %v926 = vsel %vm925, %v709, %v924
    %vm927 = vcmask 1045509
    %v928 = vsel %vm927, %v728, %v926
    %vm929 = vcmask 1046534
    %v930 = vsel %vm929, %v747, %v928
    %vm931 = vcmask 1047559
    %v932 = vsel %vm931, %v766, %v930
    %v933 = vsel %vm919, %v804, %v785
    %v934 = vsel %vm921, %v823, %v933
    %v935 = vsel %vm923, %v842, %v934
    %v936 = vsel %vm925, %v861, %v935
    %v937 = vsel %vm927, %v880, %v936
    %v938 = vsel %vm929, %v899, %v937
    %v939 = vsel %vm931, %v918, %v938
    %vm942 = vcmask 261120
    %v943 = vsel %vm942, %v932, 0.0
    %944 = vadd.xlane.f32.xlu0 %v943
    %v945 = vpop.xlane.xlu0 %944
    %v946 = vsel %vm942, %v939, 0.0
    %947 = vadd.xlane.f32.xlu0 %v946
    %v948 = vpop.xlane.xlu0 %947
    %v949 = vmul.f32 %v945, 0.5
    %v950 = vmul.f32 %v948, 0.5
    %v951 = vmul.f32 %v945, 0.70710677
    %v952 = vmul.f32 %v948, 0.70710677
    %v953 = verf.f32.pop %v951
    %v954 = verf.f32.pop %v952
    %v955 = vadd.f32 %v953, 1.0
    %v956 = vadd.f32 %v954, 1.0
    %v957 = vmul.f32 %v949, %v955
    %v958 = vmul.f32 %v950, %v956
    %v959 = vmul.f32 %v957, %v101
    %v960 = vmul.f32 %v958, %v101
    %v961 = vsel %vm942, %v959, 0.0
    %v962 = vrot.slane %v961, 4
    %v963 = vadd.f32 %v961, %v962
    %v964 = vrot.slane %v963, 2
    %v965 = vadd.f32 %v963, %v964
    %v966 = vrot.slane %v965, 1
    %v967 = vadd.f32 %v965, %v966
    %v968 = vsel %vm942, %v960, 0.0
    %v969 = vrot.slane %v968, 4
    %v970 = vadd.f32 %v968, %v969
    %v971 = vrot.slane %v970, 2
    %v972 = vadd.f32 %v970, %v971
    %v973 = vrot.slane %v972, 1
    %v974 = vadd.f32 %v972, %v973
    %v975 = vxor.u32 %v967, 2147483648
    %v976 = vxor.u32 %v974, 2147483648
    %v977 = vmul.f32 %v975, 1.442695
    %v978 = vpow.pop %v977
    %v979 = vmul.f32 %v976, 1.442695
    %v980 = vpow.pop %v979
    %v981 = vadd.f32 %v978, 1.0
    %v982 = vadd.f32 %v980, 1.0
    %v983 = vrcp.pop %v981
    %v984 = vmul.f32 1.0, %v983
    %v985 = vrcp.pop %v982
    %v986 = vmul.f32 1.0, %v985
    %988 = vbcast.lane.b32.xlu0 %v984, 256
    %v989 = vpop.permute.xlu0 %988
    %s991 = sor.u32 256, 8
    %992 = vbcast.lane.b32.xlu0 %v984, %s991
    %v993 = vpop.permute.xlu0 %992
    %s995 = sor.u32 256, 16
    %996 = vbcast.lane.b32.xlu0 %v984, %s995
    %v997 = vpop.permute.xlu0 %996
    %s999 = sor.u32 256, 24
    %1000 = vbcast.lane.b32.xlu0 %v984, %s999
    %v1001 = vpop.permute.xlu0 %1000
    %1003 = vbcast.lane.b32.xlu0 %v986, 256
    %v1004 = vpop.permute.xlu0 %1003
    %s1006 = sor.u32 256, 8
    %1007 = vbcast.lane.b32.xlu0 %v986, %s1006
    %v1008 = vpop.permute.xlu0 %1007
    %s1010 = sor.u32 256, 16
    %1011 = vbcast.lane.b32.xlu0 %v986, %s1010
    %v1012 = vpop.permute.xlu0 %1011
    %s1014 = sor.u32 256, 24
    %1015 = vbcast.lane.b32.xlu0 %v986, %s1014
    %v1016 = vpop.permute.xlu0 %1015
    %v1017 = vmul.f32 %v52, %v989
    %v1018 = vmul.f32 %v53, %v989
    %v1019 = vmul.f32 %v54, %v993
    %v1020 = vmul.f32 %v55, %v993
    %v1021 = vmul.f32 %v56, %v997
    %v1022 = vmul.f32 %v57, %v997
    %v1023 = vmul.f32 %v58, %v1001
    %v1024 = vmul.f32 %v59, %v1001
    %v1025 = vmul.f32 %v60, %v1004
    %v1026 = vmul.f32 %v61, %v1004
    %v1027 = vmul.f32 %v62, %v1008
    %v1028 = vmul.f32 %v63, %v1008
    %v1029 = vmul.f32 %v64, %v1012
    %v1030 = vmul.f32 %v65, %v1012
    %v1031 = vmul.f32 %v66, %v1016
    %v1032 = vmul.f32 %v67, %v1016
    %1033 = vst [vmem:[#allocation8] sm:$0xff] %v1017
    %1034 = vst [vmem:[#allocation8 + $0x8] sm:$0xff] %v1018
    %1035 = vst [vmem:[#allocation8 + $0x10] sm:$0xff] %v1019
    %1036 = vst [vmem:[#allocation8 + $0x18] sm:$0xff] %v1020
    %1037 = vst [vmem:[#allocation8 + $0x20] sm:$0xff] %v1021
    %1038 = vst [vmem:[#allocation8 + $0x28] sm:$0xff] %v1022
    %1039 = vst [vmem:[#allocation8 + $0x30] sm:$0xff] %v1023
    %1040 = vst [vmem:[#allocation8 + $0x38] sm:$0xff] %v1024
    %1041 = vst [vmem:[#allocation8 + $0x40] sm:$0xff] %v1025
    %1042 = vst [vmem:[#allocation8 + $0x48] sm:$0xff] %v1026
    %1043 = vst [vmem:[#allocation8 + $0x50] sm:$0xff] %v1027
    %1044 = vst [vmem:[#allocation8 + $0x58] sm:$0xff] %v1028
    %1045 = vst [vmem:[#allocation8 + $0x60] sm:$0xff] %v1029
    %1046 = vst [vmem:[#allocation8 + $0x68] sm:$0xff] %v1030
    %1047 = vst [vmem:[#allocation8 + $0x70] sm:$0xff] %v1031
    %1048 = vst [vmem:[#allocation8 + $0x78] sm:$0xff] %v1032
    // Predicated region
    $region26: #{tpu_custom_call.1} parent=1 // pred_check
      _
    $region27: #{tpu_custom_call.1} parent=1 // pred_check_branch
      %1050 = sbr.rel (0) target = $region29
    $region28: #{tpu_custom_call.1} parent=1 // pred_region
      %s1052 = ssub.s32 2048, 2048
      %1053 = vsyncadd [#allocation4], %s1052
      %s1054 = sshll.u32 [#allocation8], 4
      %s1055 = int_to_ptr.vmem [resolvable:$true] %s1054
      %1060 = dma.vmem_to_hbm [thread:$0]  %s1055, 2048, %s3, [#allocation4], 256, 256, 16
    $region29: #{tpu_custom_call.1} parent=1 // pred_fallthru
      _
    // Predicated region
    $region30: #{tpu_custom_call.1} parent=1 // pred_check
      _
    $region31: #{tpu_custom_call.1} parent=1 // pred_check_branch
      %1062 = sbr.rel (0) target = $region33
    $region32: #{tpu_custom_call.1} parent=1 // pred_region
      %1063 = dma.done [#allocation4], 2048
    $region33: #{tpu_custom_call.1} parent=1 // pred_fallthru
      _
    %1064 = vsyncpa [#allocation3], 1
    %1065 = vsyncpa [#allocation6], 1
    %1066 = vsyncpa [#allocation4], 1

</llo_original>
